<compile_context>
chip_gen: v7x
topology: tpu7x:2x2x1
jax: 0.10.0
libtpu: 0.0.40
codegen_flags: <defaults>
</compile_context>

<pallas_src>
import math
import jax
import jax.numpy as jnp
from jax.experimental import pallas as pl
from jax.experimental.pallas import tpu as pltpu


def _round_up(x, m):
    return ((x + m - 1) // m) * m


def _vmem_budget_bytes():
    # Generation-aware budget: ~72% of physical VMEM (v5e/v6e 128 MiB -> ~92 MiB,
    # v7x 64 MiB -> ~46 MiB). Conservative fallback if the query is unavailable.
    try:
        cap = pltpu.get_tpu_info().vmem_capacity_bytes
    except Exception:
        cap = 64 << 20
    return int(cap * 0.72)


# ------------------------------------------------------------------
# Kernel 1: support = x @ w   (tiled over rows of x, fully parallel)
# ------------------------------------------------------------------
def _support_kernel(x_ref, w_ref, s_ref):
    s_ref[...] = jnp.dot(
        x_ref[...], w_ref[...], preferred_element_type=jnp.float32
    ).astype(s_ref.dtype)


def compute_support(x, w, *, tile_m=512, out_dtype=None):
    N, F_in = x.shape
    F_out = w.shape[1]
    out_dtype = out_dtype or jnp.float32

    budget = _vmem_budget_bytes()
    x_item = jnp.dtype(x.dtype).itemsize
    o_item = jnp.dtype(out_dtype).itemsize

    # >= 2 row tiles when the graph is small so both v7x TensorCores get work.
    if N <= tile_m:
        tm = _round_up(pl.cdiv(N, 2), 8) if N >= 16 else N
    else:
        tm = tile_m

    def est(tm_):
        return (2 * tm_ * F_in * x_item          # double-buffered x tile
                + F_in * F_out * 4               # resident weight
                + 2 * tm_ * F_out * o_item)      # double-buffered out tile

    while est(tm) > budget and tm > 8:
        tm = max(8, _round_up(tm // 2, 8))

    Nr = _round_up(N, tm)
    x_p = jnp.pad(x, ((0, Nr - N), (0, 0))) if Nr != N else x

    out = pl.pallas_call(
        _support_kernel,
        out_shape=jax.ShapeDtypeStruct((Nr, F_out), out_dtype),
        grid_spec=pltpu.PrefetchScalarGridSpec(
            num_scalar_prefetch=0,
            grid=(Nr // tm,),
            in_specs=[
                pl.BlockSpec((tm, F_in), lambda i: (i, 0)),
                pl.BlockSpec((F_in, F_out), lambda i: (0, 0)),
            ],
            out_specs=pl.BlockSpec((tm, F_out), lambda i: (i, 0)),
        ),
        compiler_params=pltpu.CompilerParams(
            dimension_semantics=("parallel",),
            vmem_limit_bytes=budget,
        ),
    )(x_p, w)
    return out[:N] if Nr != N else out


# ------------------------------------------------------------------------
# Kernel 2: out = adj @ support + bias   (row tiles x contraction tiles)
# ------------------------------------------------------------------------
def _make_aggregate_kernel(tk, resident_support):
    def kernel(adj_ref, s_ref, b_ref, out_ref):
        k = pl.program_id(1)

        # f32 output tile is VMEM-resident across the k axis: initialize it
        # with the broadcast bias, then accumulate in place (no scratch, no
        # epilogue copy, no separate bias add).
        @pl.when(k == 0)
        def _():
            out_ref[...] = jnp.broadcast_to(
                b_ref[...].astype(jnp.float32), out_ref.shape
            )

        if resident_support:
            start = pl.multiple_of(k * tk, tk)
            s_tile = s_ref[pl.ds(start, tk), :]
        else:
            s_tile = s_ref[...]

        out_ref[...] += jnp.dot(
            adj_ref[...], s_tile, preferred_element_type=jnp.float32
        )

    return kernel


def aggregate(adj, support, b, *, tile_m=512, tile_k=1024):
    N, Nk = adj.shape
    F_out = support.shape[1]
    if b is None:
        b = jnp.zeros((F_out,), jnp.float32)
    b2d = jnp.asarray(b, jnp.float32).reshape(1, F_out)

    budget = _vmem_budget_bytes()
    adj_item = jnp.dtype(adj.dtype).itemsize
    sup_item = jnp.dtype(support.dtype).itemsize

    # --- row tile: keep >= 2 tiles for megacore when the graph is small ---
    if N <= tile_m:
        tm = _round_up(pl.cdiv(N, 2), 8) if N >= 16 else N
    else:
        tm = tile_m

    # --- contraction tile: always bounded (never tk = N for large N) ---
    tk = Nk if Nk <= tile_k else tile_k

    # Shrink tiles to stay inside the generation-aware VMEM budget.
    while 2 * tm * tk * adj_item > budget // 2 and tk > 128:
        tk = max(128, _round_up(tk // 2, 128))
    while 2 * tm * tk * adj_item > budget // 2 and tm > 8:
        tm = max(8, _round_up(tm // 2, 8))

    Nk_pad = _round_up(Nk, tk)
    Nr_pad = _round_up(N, tm)

    # Keep support fully VMEM-resident (constant block index -> DMA'd once)
    # when it comfortably fits; otherwise stream per-k tiles.
    sup_resident_bytes = Nk_pad * F_out * sup_item
    resident = sup_resident_bytes <= budget // 3

    # Zero padding is numerically inert (zero adj cols / zero support rows).
    # TODO(synk): callers with static graphs should pre-pad adj/support once
    # upstream to avoid the per-call padding pass.
    if Nr_pad != N or Nk_pad != Nk:
        adj = jnp.pad(adj, ((0, Nr_pad - N), (0, Nk_pad - Nk)))
    if Nk_pad != Nk:
        support = jnp.pad(support, ((0, Nk_pad - Nk), (0, 0)))

    if resident:
        s_spec = pl.BlockSpec((Nk_pad, F_out), lambda i, k: (0, 0))
    else:
        s_spec = pl.BlockSpec((tk, F_out), lambda i, k: (k, 0))

    grid = (Nr_pad // tm, Nk_pad // tk)
    out = pl.pallas_call(
        _make_aggregate_kernel(tk, resident),
        out_shape=jax.ShapeDtypeStruct((Nr_pad, F_out), jnp.float32),
        grid_spec=pltpu.PrefetchScalarGridSpec(
            num_scalar_prefetch=0,
            grid=grid,
            in_specs=[
                pl.BlockSpec((tm, tk), lambda i, k: (i, k)),     # adj tile
                s_spec,                                          # support
                pl.BlockSpec((1, F_out), lambda i, k: (0, 0)),   # bias
            ],
            out_specs=pl.BlockSpec((tm, F_out), lambda i, k: (i, 0)),
        ),
        compiler_params=pltpu.CompilerParams(
            # Rows are independent (megacore-shardable on v7x); the contraction
            # axis accumulates into the resident output tile -> sequential.
            dimension_semantics=("parallel", "arbitrary"),
            vmem_limit_bytes=budget,
        ),
    )(adj, support, b2d)
    return out[:N] if Nr_pad != N else out


# ------------------------------------------------------------------------
# Full GCN forward
# ------------------------------------------------------------------------
def gcn_forward(x, w, adj, b=None, *, tile_m=512, tile_k=1024, adj_dtype=None):
    """GraphConvolution forward: adj @ (x @ w) + b.

    adj_dtype=jnp.bfloat16 halves the dominant adjacency HBM stream (the kernel
    is adj-bandwidth-bound); accumulation stays f32. For best results store adj
    in bf16 upstream (cached) instead of casting per call.
    """
    support_dtype = adj_dtype if adj_dtype is not None else jnp.float32
    support = compute_support(x, w, tile_m=tile_m, out_dtype=support_dtype)
    if adj_dtype is not None and adj.dtype != jnp.dtype(adj_dtype):
        # TODO(synk): this per-call cast costs an extra full HBM pass; callers
        # should cache the bf16 adjacency instead.
        adj = adj.astype(adj_dtype)
    return aggregate(adj, support, b, tile_m=tile_m, tile_k=tile_k)


def init_params(key, in_features, out_features):
    # Matches reset_parameters_xavier(): xavier_normal_ with gain=0.02, bias=0.
    std = 0.02 * math.sqrt(2.0 / (in_features + out_features))
    w = std * jax.random.normal(key, (in_features, out_features), dtype=jnp.float32)
    b = jnp.zeros((out_features,), dtype=jnp.float32)
    return w, b


if __name__ == "__main__":
    N, F_in, F_out = 128, 64, 32

    key = jax.random.PRNGKey(0)
    k_x, k_adj, k_w = jax.random.split(key, 3)

    x = jax.random.normal(k_x, (N, F_in), dtype=jnp.float32)
    # Dense normalized adjacency (torch.spmm is semantically just a matmul).
    adj_raw = (jax.random.uniform(k_adj, (N, N)) < 0.1).astype(jnp.float32)
    adj = adj_raw + jnp.eye(N, dtype=jnp.float32)
    deg = jnp.sum(adj, axis=1, keepdims=True)
    adj = adj / deg

    w, b = init_params(k_w, F_in, F_out)

    # Reference in plain JAX.
    ref = adj @ (x @ w) + b[None, :]

    # f32 path (exact-ish).
    out = jax.block_until_ready(gcn_forward(x, w, adj, b))
    assert out.shape == (N, F_out)
    assert jnp.allclose(out, ref, atol=1e-4, rtol=1e-4), "f32 mismatch vs reference"

    # bf16 adjacency/support path (halves the dominant HBM stream); numerics
    # change slightly, so check with a loose tolerance.
    out_bf16 = jax.block_until_ready(gcn_forward(x, w, adj, b, adj_dtype=jnp.bfloat16))
    assert out_bf16.shape == (N, F_out)
    assert jnp.allclose(out_bf16, ref, atol=1e-2, rtol=1e-1), "bf16 mismatch vs reference"

    print("KERNEL_OK")
</pallas_src>

<mosaic_0001>
module attributes {stable_mosaic.version = 11 : i64} {
  func.func @_support_kernel(%arg0: i32, %arg1: memref<64x64xf32, #tpu.memory_space<vmem>>, %arg2: memref<64x32xf32, #tpu.memory_space<vmem>>, %arg3: memref<64x32xf32, #tpu.memory_space<vmem>>) attributes {dimension_semantics = [#tpu.dimension_semantics<parallel>], iteration_bounds = array<i64: 2>, scalar_prefetch = 0 : i64, scratch_operands = 0 : i64, tpu.core_type = #tpu.core_type<tc>, window_params = [{transform_indices = @transform_0, window_bounds = array<i64: 64, 64>}, {pipeline_mode = #tpu.pipeline_mode<synchronous>, transform_indices = @transform_1, window_bounds = array<i64: 64, 32>}, {transform_indices = @transform_2, window_bounds = array<i64: 64, 32>}]} {
    %c0 = arith.constant 0 : index
    %c0_0 = arith.constant 0 : index
    %0 = vector.load %arg1[%c0, %c0_0] : memref<64x64xf32, #tpu.memory_space<vmem>>, vector<64x64xf32>
    %c0_1 = arith.constant 0 : index
    %c0_2 = arith.constant 0 : index
    %1 = vector.load %arg2[%c0_1, %c0_2] : memref<64x32xf32, #tpu.memory_space<vmem>>, vector<64x32xf32>
    %cst = arith.constant dense<0.000000e+00> : vector<64x32xf32>
    %2 = tpu.matmul %0, %1, %cst {dimension_numbers = #tpu.dot_dimension_numbers<[1], [0], [0], [1], [0, 0, 1, 1], [], []>} : vector<64x64xf32>, vector<64x32xf32>, vector<64x32xf32> -> vector<64x32xf32>
    %c0_3 = arith.constant 0 : index
    %c0_4 = arith.constant 0 : index
    %3 = vector.load %arg3[%c0_3, %c0_4] : memref<64x32xf32, #tpu.memory_space<vmem>>, vector<64x32xf32>
    tpu.vector_store %arg3[%c0_3, %c0_4], %2 {strides = array<i32>} : memref<64x32xf32, #tpu.memory_space<vmem>>, vector<64x32xf32>,
    return
  }
  func.func @transform_0(%arg0: i32) -> (i32, i32) {
    %c0_i32 = arith.constant 0 : i32
    %c0_i32_0 = arith.constant 0 : i32
    return %arg0, %c0_i32 : i32, i32
  }
  func.func @transform_1(%arg0: i32) -> (i32, i32) {
    %c0_i32 = arith.constant 0 : i32
    %c0_i32_0 = arith.constant 0 : i32
    %c0_i32_1 = arith.constant 0 : i32
    return %c0_i32, %c0_i32_0 : i32, i32
  }
  func.func @transform_2(%arg0: i32) -> (i32, i32) {
    %c0_i32 = arith.constant 0 : i32
    %c0_i32_0 = arith.constant 0 : i32
    return %arg0, %c0_i32 : i32, i32
  }
}

</mosaic_0001>

<llo_original>
// kernel: tpu_custom_call.1
$region0: #{tpu_custom_call.1}
  #allocation0 [shape = 'u32[]', space=smem, size = 0x4, offset = 0x4, fixed_abs, tag = 'smem constant byte address 0x4 - core index']
  #allocation1 [shape = 'u32[144,128]{1,0:T(1,128)}', space=vmem, size = 0x12000, scoped, tag = 'internal scratch']
  %s0 = inlined_call_operand.vmem [shape: f32[128,64], index: 0, kind: input, shape index: {}]
  %s1 = inlined_call_operand.vmem [shape: f32[64,32], index: 1, kind: input, shape index: {}]
  %s2 = inlined_call_operand.vmem [shape: f32[128,32], index: 2, kind: output, shape index: {}]
  %s3 = sld [smem:[#allocation0]]
  $region41: #{tpu_custom_call.1} parent=0
    _
  %s5 = ssub.s32 1, %s3
  %s6 = scalar_select 0, %s5, %s3
  loop: start=0, step=1, limit=4
  $region2: #{tpu_custom_call.1} parent=0 // loop_pre_header
    _
  $region3: #{tpu_custom_call.1} parent=0 // loop_header
    %s8 = sphi 0, %s12
    %p9 = scmp.ge.s32.totalorder %s8, 4
    %s18 = sphi 0, %s20
    %s21 = sphi 0, %s18
    %s22 = sphi 0, %s21
    %s38 = sphi 0, %s22
    %s42 = sphi 0, %s42
    %s44 = sphi 0, %s42
    %s45 = sphi 0, %s44
    %s59 = sphi 0, %s45
    %s65 = sphi 0, %s67
    %s68 = sphi 0, %s65
    %s69 = sphi 0, %s68
    %s85 = sphi 0, %s69
  $region4: #{tpu_custom_call.1} parent=0 // loop_header_branch
    %11 = sbr.rel (%p9) target = $region8
  $region5: #{tpu_custom_call.1} parent=0 // loop_body
    %s13 = ssub.s32 %s8, 1
    %s14 = ssub.s32 %s8, 2
    %s15 = sadd.s32 %s8, 1
    %s16 = ssub.s32 %s8, %s15
    %p17 = scmp.eq.s32.totalorder %s16, 0
    %s19 = sadd.s32 %s18, 1
    %s20 = scalar_select %p17, %s18, %s19
    %p23 = pneg %p17
    %p24 = scmp.eq.s32.totalorder %s8, 1
    %p25 = por %p23, %p24
    %p26 = scmp.ne.s32.totalorder %s18, %s21
    %p27 = scmp.eq.s32.totalorder %s8, 0
    %p28 = por %p26, %p27
    %p29 = scmp.ne.s32.totalorder %s18, %s21
    %p30 = scmp.eq.s32.totalorder %s13, 1
    %p31 = por %p29, %p30
    %p32 = scmp.ne.s32.totalorder %s21, %s22
    %p33 = scmp.eq.s32.totalorder %s13, 0
    %p34 = por %p32, %p33
    %p35 = scmp.ne.s32.totalorder %s21, %s22
    %p36 = scmp.eq.s32.totalorder %s14, 1
    %p37 = por %p35, %p36
    %p39 = scmp.ne.s32.totalorder %s22, %s38
    %p40 = scmp.eq.s32.totalorder %s14, 0
    %p41 = por %p39, %p40
    %s43 = sadd.s32 %s42, 1
    %p46 = scmp.eq.s32.totalorder %s8, 1
    %p47 = scmp.ne.s32.totalorder %s42, %s44
    %p48 = scmp.eq.s32.totalorder %s8, 0
    %p49 = por %p47, %p48
    %p50 = scmp.ne.s32.totalorder %s42, %s44
    %p51 = scmp.eq.s32.totalorder %s13, 1
    %p52 = por %p50, %p51
    %p53 = scmp.ne.s32.totalorder %s44, %s45
    %p54 = scmp.eq.s32.totalorder %s13, 0
    %p55 = por %p53, %p54
    %p56 = scmp.ne.s32.totalorder %s44, %s45
    %p57 = scmp.eq.s32.totalorder %s14, 1
    %p58 = por %p56, %p57
    %p60 = scmp.ne.s32.totalorder %s45, %s59
    %p61 = scmp.eq.s32.totalorder %s14, 0
    %p62 = por %p60, %p61
    %s63 = ssub.s32 %s8, %s15
    %p64 = scmp.eq.s32.totalorder %s63, 0
    %s66 = sadd.s32 %s65, 1
    %s67 = scalar_select %p64, %s65, %s66
    %p70 = pneg %p64
    %p71 = scmp.eq.s32.totalorder %s8, 1
    %p72 = por %p70, %p71
    %p73 = scmp.ne.s32.totalorder %s65, %s68
    %p74 = scmp.eq.s32.totalorder %s8, 0
    %p75 = por %p73, %p74
    %p76 = scmp.ne.s32.totalorder %s65, %s68
    %p77 = scmp.eq.s32.totalorder %s13, 1
    %p78 = por %p76, %p77
    %p79 = scmp.ne.s32.totalorder %s68, %s69
    %p80 = scmp.eq.s32.totalorder %s13, 0
    %p81 = por %p79, %p80
    %p82 = scmp.ne.s32.totalorder %s68, %s69
    %p83 = scmp.eq.s32.totalorder %s14, 1
    %p84 = por %p82, %p83
    %p86 = scmp.ne.s32.totalorder %s69, %s85
    %p87 = scmp.eq.s32.totalorder %s14, 0
    %p88 = por %p86, %p87
    %p89 = scmp.le.s32.totalorder 1, %s8
    %p90 = scmp.lt.s32.totalorder %s8, 3
    %p91 = pnand %p89, %p90
    %p92 = pneg %p91
    // Predicated region
    $region9: #{tpu_custom_call.1} parent=5 // pred_check
      _
    $region10: #{tpu_custom_call.1} parent=5 // pred_check_branch
      %94 = sbr.rel (%p91) target = $region12
    $region11: #{tpu_custom_call.1} parent=5 // pred_region
      %s95 = ssub.s32 %s8, 1
      // Predicated region
      $region13: #{tpu_custom_call.1} parent=11 // pred_check
        %p96 = pneg %p55
      $region14: #{tpu_custom_call.1} parent=11 // pred_check_branch
        %98 = sbr.rel (%p96) target = $region16
      $region15: #{tpu_custom_call.1} parent=11 // pred_region
        _
      $region16: #{tpu_custom_call.1} parent=11 // pred_fallthru
        _
    $region12: #{tpu_custom_call.1} parent=5 // pred_fallthru
      _
    %p99 = scmp.lt.s32.totalorder %s8, 2
    // Predicated region
    $region17: #{tpu_custom_call.1} parent=5 // pred_check
      %p100 = pneg %p99
    $region18: #{tpu_custom_call.1} parent=5 // pred_check_branch
      %102 = sbr.rel (%p100) target = $region20
    $region19: #{tpu_custom_call.1} parent=5 // pred_region
      // Predicated region
      $region21: #{tpu_custom_call.1} parent=19 // pred_check
        %p103 = pneg %p28
      $region22: #{tpu_custom_call.1} parent=19 // pred_check_branch
        %105 = sbr.rel (%p103) target = $region24
      $region23: #{tpu_custom_call.1} parent=19 // pred_region
        %s106 = smul.u32 8, %s8
        %p107 = scmp.lt.s32.totalorder %s106, 15
        %s108 = scalar_select %p107, %s106, 15
        %s109 = smul.addr %s108, 8
        %s110 = scalar_lea.vmem %s0, %s109
        %s111 = smul.u32 8, %s8
      $region24: #{tpu_custom_call.1} parent=19 // pred_fallthru
        _
    $region20: #{tpu_custom_call.1} parent=5 // pred_fallthru
      _
    %p112 = scmp.le.s32.totalorder 1, %s8
    %p113 = scmp.lt.s32.totalorder %s8, 3
    %p114 = pnand %p112, %p113
    %p115 = pneg %p114
    // Predicated region
    $region25: #{tpu_custom_call.1} parent=5 // pred_check
      _
    $region26: #{tpu_custom_call.1} parent=5 // pred_check_branch
      %117 = sbr.rel (%p114) target = $region28
    $region27: #{tpu_custom_call.1} parent=5 // pred_region
      %s118 = ssub.s32 %s8, 1
      %s119 = smul.u32 8, %s13
      %p120 = scmp.lt.s32.totalorder %s119, 15
      %s121 = scalar_select %p120, %s119, 15
      %s122 = smul.addr %s121, 8
      %s123 = scalar_lea.vmem %s0, %s122
      %p124 = pneg %p34
      %p125 = pneg %p31
      %p126 = pneg %p55
      %p127 = pneg %p52
      %p128 = pneg %p81
      %p129 = pneg %p78
      %s130 = smul.u32 8, %s13
      %p131 = scmp.lt.s32.totalorder %s130, 15
      %s132 = scalar_select %p131, %s130, 15
      %s133 = smul.addr %s132, 8
      %s134 = scalar_lea.vmem %s2, %s133
      %s135 = smul.u32 8, %s13
      %p136 = scmp.lt.s32.totalorder %s135, 15
      %s137 = scalar_select %p136, %s135, 15
      %s138 = smul.addr %s137, 8
      %s139 = scalar_lea.vmem %s0, %s138
      %s140 = smul.u32 8, %s13
      %s141 = smul.u32 8, %s13
      %p142 = scmp.lt.s32.totalorder %s141, 15
      %s143 = scalar_select %p142, %s141, 15
      %s144 = smul.addr %s143, 8
      %s145 = scalar_lea.vmem %s2, %s144
      %s146 = smul.u32 8, %s13
      %v147 = vld [vmem:[%s139] sm:$0xff]
      %v148 = vld [vmem:[%s139 + $0x8] sm:$0xff]
      %v149 = vld [vmem:[%s139 + $0x10] sm:$0xff]
      %v150 = vld [vmem:[%s139 + $0x18] sm:$0xff]
      %v151 = vld [vmem:[%s139 + $0x20] sm:$0xff]
      %v152 = vld [vmem:[%s139 + $0x28] sm:$0xff]
      %v153 = vld [vmem:[%s139 + $0x30] sm:$0xff]
      %v154 = vld [vmem:[%s139 + $0x38] sm:$0xff]
      %v155 = vld [vmem:[%s1] sm:$0xff]
      %v156 = vld [vmem:[%s1 + $0x8] sm:$0xff]
      %v157 = vld [vmem:[%s1 + $0x10] sm:$0xff]
      %v158 = vld [vmem:[%s1 + $0x18] sm:$0xff]
      %v159 = vld [vmem:[%s1 + $0x20] sm:$0xff]
      %v160 = vld [vmem:[%s1 + $0x28] sm:$0xff]
      %v161 = vld [vmem:[%s1 + $0x30] sm:$0xff]
      %v162 = vld [vmem:[%s1 + $0x38] sm:$0xff]
      %vm163 = vcmask 523264
      %v165 = vsel %vm163, %v147, 0
      %v168 = vsel %vm163, %v148, 0
      %v171 = vsel %vm163, %v149, 0
      %v174 = vsel %vm163, %v150, 0
      %v177 = vsel %vm163, %v151, 0
      %v180 = vsel %vm163, %v152, 0
      %v183 = vsel %vm163, %v153, 0
      %v186 = vsel %vm163, %v154, 0
      %188 = vmatprep.subr.mxu0 0.0
      %189 = vmatpush1.msra.mxu0 %v155
      %190 = vmatprep.subr.mxu0 0.0
      %191 = vmatpush1.msra.mxu0 %v156
      %192 = vmatprep.subr.mxu0 0.0
      %193 = vmatpush1.msra.mxu0 %v157
      %194 = vmatprep.subr.mxu0 0.0
      %195 = vmatpush1.msra.mxu0 %v158
      %196 = vmatprep.subr.mxu0 0.0
      %197 = vmatpush1.msra.mxu0 %v159
      %198 = vmatprep.subr.mxu0 0.0
      %199 = vmatpush1.msra.mxu0 %v160
      %200 = vmatprep.subr.mxu0 0.0
      %201 = vmatpush1.msra.mxu0 %v161
      %202 = vmatprep.subr.mxu0 0.0
      %203 = vmatpush1.msra.mxu0 %v162
      %204 = vmatprep.subr.mxu0 0.0
      %205 = vmatpush1.msra.mxu0 0.0
      %206 = vmatprep.subr.mxu0 0.0
      %207 = vmatpush1.msra.mxu0 0.0
      %208 = vmatprep.subr.mxu0 0.0
      %209 = vmatpush1.msra.mxu0 0.0
      %210 = vmatprep.subr.mxu0 0.0
      %211 = vmatpush1.msra.mxu0 0.0
      %212 = vmatprep.subr.mxu0 0.0
      %213 = vmatpush1.msra.mxu0 0.0
      %214 = vmatprep.subr.mxu0 0.0
      %215 = vmatpush1.msra.mxu0 0.0
      %216 = vmatprep.subr.mxu0 0.0
      %217 = vmatpush1.msra.mxu0 0.0
      %218 = vmatprep.subr.mxu0 0.0
      %219 = vmatpush1.msra.mxu0 0.0
      %220 = vmatprep.subr.mxu0 0.0
      %221 = vmatpush1.msra.mxu0 0.0
      %222 = vmatprep.subr.mxu0 0.0
      %223 = vmatpush1.msra.mxu0 0.0
      %224 = vmatprep.subr.mxu0 0.0
      %225 = vmatpush1.msra.mxu0 0.0
      %226 = vmatprep.subr.mxu0 0.0
      %227 = vmatpush1.msra.mxu0 0.0
      %228 = vmatprep.subr.mxu0 0.0
      %229 = vmatpush1.msra.mxu0 0.0
      %230 = vmatprep.subr.mxu0 0.0
      %231 = vmatpush1.msra.mxu0 0.0
      %232 = vmatprep.subr.mxu0 0.0
      %233 = vmatpush1.msra.mxu0 0.0
      %234 = vmatprep.subr.mxu0 0.0
      %235 = vmatpush1.msra.mxu0 0.0
      %236 = vmatprep.subr.mxu0 0.0
      %237 = vmatpush1.msra.mxu0 0.0
      %238 = vmatprep.subr.mxu0 0.0
      %239 = vmatpush1.msra.mxu0 0.0
      %240 = vmatprep.subr.mxu0 0.0
      %241 = vmatpush1.msra.mxu0 0.0
      %242 = vmatprep.subr.mxu0 0.0
      %243 = vmatpush1.msra.mxu0 0.0
      %244 = vmatprep.subr.mxu0 0.0
      %245 = vmatpush1.msra.mxu0 0.0
      %246 = vmatprep.subr.mxu0 0.0
      %247 = vmatpush1.msra.mxu0 0.0
      %248 = vmatprep.subr.mxu0 0.0
      %249 = vmatpush1.msra.mxu0 0.0
      %250 = vmatprep.subr.mxu0 0.0
      %251 = vmatpush1.msra.mxu0 0.0
      %252 = vmatprep.mubr.f32.mxu0 0.0
      %253 = vmatmul.mubr.f32.gmra.mrb[0].mxu0 %v165
      %v254 = vpop.f32.mrb[0].mxu0
      %v255 = vadd.f32 0.0, %v254
      %v256 = vpop.f32.mrb[0].mxu0
      %257 = vmatprep.mubr.f32.mxu0 0.0
      %258 = vmatmul.mubr.f32.gmra.mrb[0].mxu0 %v168
      %v259 = vpop.f32.mrb[0].mxu0
      %v260 = vadd.f32 0.0, %v259
      %v261 = vpop.f32.mrb[0].mxu0
      %262 = vmatprep.mubr.f32.mxu0 0.0
      %263 = vmatmul.mubr.f32.gmra.mrb[0].mxu0 %v171
      %v264 = vpop.f32.mrb[0].mxu0
      %v265 = vadd.f32 0.0, %v264
      %v266 = vpop.f32.mrb[0].mxu0
      %267 = vmatprep.mubr.f32.mxu0 0.0
      %268 = vmatmul.mubr.f32.gmra.mrb[0].mxu0 %v174
      %v269 = vpop.f32.mrb[0].mxu0
      %v270 = vadd.f32 0.0, %v269
      %v271 = vpop.f32.mrb[0].mxu0
      %272 = vmatprep.mubr.f32.mxu0 0.0
      %273 = vmatmul.mubr.f32.gmra.mrb[0].mxu0 %v177
      %v274 = vpop.f32.mrb[0].mxu0
      %v275 = vadd.f32 0.0, %v274
      %v276 = vpop.f32.mrb[0].mxu0
      %277 = vmatprep.mubr.f32.mxu0 0.0
      %278 = vmatmul.mubr.f32.gmra.mrb[0].mxu0 %v180
      %v279 = vpop.f32.mrb[0].mxu0
      %v280 = vadd.f32 0.0, %v279
      %v281 = vpop.f32.mrb[0].mxu0
      %282 = vmatprep.mubr.f32.mxu0 0.0
      %283 = vmatmul.mubr.f32.gmra.mrb[0].mxu0 %v183
      %v284 = vpop.f32.mrb[0].mxu0
      %v285 = vadd.f32 0.0, %v284
      %v286 = vpop.f32.mrb[0].mxu0
      %287 = vmatprep.mubr.f32.mxu0 0.0
      %288 = vmatmul.mubr.f32.gmra.mrb[0].mxu0 %v186
      %v289 = vpop.f32.mrb[0].mxu0
      %v290 = vadd.f32 0.0, %v289
      %v291 = vpop.f32.mrb[0].mxu0
      %292 = vdwg.mxu0
      %vm293 = vcmask 261120
      %294 = vst.msk [vmem:[%s145] sm:$0xff] %vm293, %v255
      %295 = vst.msk [vmem:[%s145 + $0x8] sm:$0xff] %vm293, %v260
      %296 = vst.msk [vmem:[%s145 + $0x10] sm:$0xff] %vm293, %v265
      %297 = vst.msk [vmem:[%s145 + $0x18] sm:$0xff] %vm293, %v270
      %298 = vst.msk [vmem:[%s145 + $0x20] sm:$0xff] %vm293, %v275
      %299 = vst.msk [vmem:[%s145 + $0x28] sm:$0xff] %vm293, %v280
      %300 = vst.msk [vmem:[%s145 + $0x30] sm:$0xff] %vm293, %v285
      %301 = vst.msk [vmem:[%s145 + $0x38] sm:$0xff] %vm293, %v290
      %s302 = smul.u32 8, %s13
      %p303 = scmp.lt.s32.totalorder %s302, 15
      %s304 = scalar_select %p303, %s302, 15
      %s305 = smul.addr %s304, 8
      %s306 = scalar_lea.vmem %s2, %s305
      // Predicated region
      $region29: #{tpu_custom_call.1} parent=27 // pred_check
        %p307 = pneg %p78
      $region30: #{tpu_custom_call.1} parent=27 // pred_check_branch
        %309 = sbr.rel (%p307) target = $region32
      $region31: #{tpu_custom_call.1} parent=27 // pred_region
        %s310 = smul.u32 8, %s13
      $region32: #{tpu_custom_call.1} parent=27 // pred_fallthru
        _
    $region28: #{tpu_custom_call.1} parent=5 // pred_fallthru
      _
    %p311 = scmp.le.s32.totalorder 2, %s8
    // Predicated region
    $region33: #{tpu_custom_call.1} parent=5 // pred_check
      %p312 = pneg %p311
    $region34: #{tpu_custom_call.1} parent=5 // pred_check_branch
      %314 = sbr.rel (%p312) target = $region36
    $region35: #{tpu_custom_call.1} parent=5 // pred_region
      %s315 = ssub.s32 %s8, 2
      // Predicated region
      $region37: #{tpu_custom_call.1} parent=35 // pred_check
        %p316 = pneg %p84
      $region38: #{tpu_custom_call.1} parent=35 // pred_check_branch
        %318 = sbr.rel (%p316) target = $region40
      $region39: #{tpu_custom_call.1} parent=35 // pred_region
        %s319 = smul.u32 8, %s14
        %p320 = scmp.lt.s32.totalorder %s319, 15
        %s321 = scalar_select %p320, %s319, 15
        %s322 = smul.addr %s321, 8
        %s323 = scalar_lea.vmem %s2, %s322
      $region40: #{tpu_custom_call.1} parent=35 // pred_fallthru
        _
    $region36: #{tpu_custom_call.1} parent=5 // pred_fallthru
      _
  $region6: #{tpu_custom_call.1} parent=0 // loop_footer
    %s12 = sadd.s32 1, %s8
  $region7: #{tpu_custom_call.1} parent=0 // loop_footer_branch
    %7 = sbr.rel target = $region3
  $region8: #{tpu_custom_call.1} parent=0 // loop_exit
    _

</llo_original>
